<compile_context>
chip_gen: v5e
topology: v5e:2x2
jax: 0.10.0
libtpu: 0.0.40
codegen_flags: <defaults>
</compile_context>

<pallas_src>
import jax
import jax.numpy as jnp
from jax import lax
from jax.experimental import pallas as pl
from jax.experimental.pallas import tpu as pltpu  # noqa: F401  (not needed for this single-step kernel)

# ----------------------------- configuration --------------------------------
DIM = 32            # model dim
HEADS = 4           # attention heads
HEAD_DIM = DIM // HEADS
WINDOW = 8          # window size
BATCH = 2
SEQ = 16            # sequence length; multiple of WINDOW
NUM_WINDOWS = SEQ // WINDOW


# ------------------------------ Pallas kernel --------------------------------
def _fused_attn_kernel(x_ref, wqk_ref, wvo_ref, bias_ref, bout_ref, o_ref):
    """Single-step fused windowed attention over the flattened token slab.

    x_ref    : (M, D)         flattened tokens, M = B * SEQ
    wqk_ref  : (H, D, 2*Dh)   per-head [Wq * 1/sqrt(D) | Wk] projection
    wvo_ref  : (H, D, D)      per-head Wv @ Wout (value + output proj fused)
    bias_ref : (H, M, M)      block-diagonal learned bias, -1e9 off-window
    bout_ref : (1, D)         output bias
    o_ref    : (M, D)         output tokens
    """
    m, d = x_ref.shape
    dh = HEAD_DIM

    x = x_ref[...]
    # One leading-axis broadcast (hoisted, done once) so all dots batch over H.
    xb = jnp.broadcast_to(x[None, :, :], (HEADS, m, d))          # (H, M, D)

    # Head-batched q|k projection: K=32 contractions, no lane slicing of a
    # fused (M, 3D) qkv and no (W, WS, Dh) reshapes.
    qk = lax.dot_general(xb, wqk_ref[...], (((2,), (1,)), ((0,), (0,))),
                         preferred_element_type=jnp.float32)     # (H, M, 2*Dh)
    q = qk[..., :dh]
    k = qk[..., dh:]

    # Full-token scores per head; the block-diagonal bias+mask applies the
    # window structure (batch boundaries coincide with window edges).
    s = lax.dot_general(q, k, (((2,), (2,)), ((0,), (0,))),
                        preferred_element_type=jnp.float32)      # (H, M, M)
    s = s + bias_ref[...]

    # Exact, numerically-stable f32 softmax; off-window entries become exactly
    # 0 after exp, so this equals the per-window softmax of the reference.
    s = s - jnp.max(s, axis=-1, keepdims=True)
    p = jnp.exp(s)
    p = p / jnp.sum(p, axis=-1, keepdims=True)

    # Fused value + output projection (K=32), then attention apply (K=32).
    vo = lax.dot_general(xb, wvo_ref[...], (((2,), (1,)), ((0,), (0,))),
                         preferred_element_type=jnp.float32)     # (H, M, D)
    outh = lax.dot_general(p, vo, (((2,), (1,)), ((0,), (0,))),
                           preferred_element_type=jnp.float32)   # (H, M, D)

    # Head reduction: 3 VALU adds of an (M, D) tile (no shallow K=8 pushes).
    out = outh[0]
    for hi in range(1, HEADS):
        out = out + outh[hi]
    o_ref[...] = (out + bout_ref[...]).astype(o_ref.dtype)


# ------------------------------ wrapper ---------------------------------------
def sparse_attention_forward(kparams, x):
    b, n, d = x.shape
    m = b * n
    # Single pallas_call, single step, whole arrays resident in VMEM
    # (total footprint ~60 KB, far under any generation's scoped-VMEM limit).
    out2d = pl.pallas_call(
        _fused_attn_kernel,
        out_shape=jax.ShapeDtypeStruct((m, d), x.dtype),
    )(x.reshape(m, d), kparams["w_qk_heads"], kparams["w_vo_heads"],
      kparams["bias_mask"], kparams["b_out_2d"])
    return out2d.reshape(b, n, d)


# ----------------------------- parameters -------------------------------------
def init_params(key):
    k1, k2, k3, k4 = jax.random.split(key, 4)
    return {
        "w_qkv": jax.random.normal(k1, (DIM, 3 * DIM), jnp.float32) * 0.05,
        "w_out": jax.random.normal(k2, (DIM, DIM), jnp.float32) * 0.05,
        "b_out": jax.random.normal(k3, (DIM,), jnp.float32) * 0.01,
        "local_attn": jax.random.normal(k4, (HEADS, WINDOW, WINDOW), jnp.float32),
        # (the global-token parameters of the reference are dead code; omitted)
    }


def prepare_params(params):
    """One-time, host-side parameter transform for the fused kernel:
      * fold the 1/sqrt(dim) scale into the Q columns,
      * re-layout q/k weights head-major (H, D, 2*Dh),
      * fold W_out into the per-head value projection: Wvo_h = Wv_h @ Wout_h,
      * build the block-diagonal (H, M, M) bias+mask for the flattened slab,
      * reshape the output bias to 2-D.
    """
    scale = float(DIM) ** -0.5
    wq = params["w_qkv"][:, :DIM] * scale
    wk = params["w_qkv"][:, DIM:2 * DIM]
    wv = params["w_qkv"][:, 2 * DIM:]

    def to_heads(w):  # (D, D) -> (H, D, Dh); head h uses output cols h*Dh:(h+1)*Dh
        return w.reshape(DIM, HEADS, HEAD_DIM).transpose(1, 0, 2)

    wq_h, wk_h, wv_h = map(to_heads, (wq, wk, wv))
    w_qk_heads = jnp.concatenate([wq_h, wk_h], axis=-1)            # (H, D, 2*Dh)

    w_out_h = params["w_out"].reshape(HEADS, HEAD_DIM, DIM)        # (H, Dh, D)
    w_vo_heads = jnp.einsum("hdk,hkc->hdc", wv_h, w_out_h,
                            precision=lax.Precision.HIGHEST)       # (H, D, D)

    m = BATCH * SEQ
    nblk = m // WINDOW
    blockdiag = jnp.kron(jnp.eye(nblk, dtype=jnp.float32),
                         jnp.ones((WINDOW, WINDOW), jnp.float32))  # (M, M)
    bias_tiled = jnp.tile(params["local_attn"], (1, nblk, nblk))   # (H, M, M)
    bias_mask = jnp.where(blockdiag[None] > 0.5, bias_tiled,
                          jnp.float32(-1e9)).astype(jnp.float32)

    return {
        "w_qk_heads": w_qk_heads.astype(jnp.float32),
        "w_vo_heads": w_vo_heads.astype(jnp.float32),
        "bias_mask": bias_mask,
        "b_out_2d": params["b_out"].reshape(1, DIM),
    }


# ------------------------------- pure-JAX reference ---------------------------
def reference_forward(params, x):
    b, n, d = x.shape
    h, dh, ws = HEADS, HEAD_DIM, WINDOW
    w = n // ws

    qkv = x @ params["w_qkv"]
    q, k, v = jnp.split(qkv, 3, axis=-1)

    def to_windows(t):
        t = t.reshape(b, n, h, dh).transpose(0, 2, 1, 3)
        return t.reshape(b, h, w, ws, dh)

    q, k, v = map(to_windows, (q, k, v))
    local = jnp.einsum("bhwnd,bhwmd->bhwnm", q, k) * (float(d) ** -0.5)
    local = local + params["local_attn"][None, :, None]
    attn = jax.nn.softmax(local, axis=-1)
    out = jnp.einsum("bhwnm,bhwmd->bhwnd", attn, v)
    out = out.transpose(0, 2, 3, 1, 4).reshape(b, n, d)
    return out @ params["w_out"] + params["b_out"]


# ------------------------------------ main ------------------------------------
if __name__ == "__main__":
    key = jax.random.PRNGKey(0)
    k_param, k_x = jax.random.split(key)
    params = init_params(k_param)
    x = jax.random.normal(k_x, (BATCH, SEQ, DIM), jnp.float32)

    kparams = prepare_params(params)                 # one-time transform
    fwd = jax.jit(sparse_attention_forward)

    y = jax.block_until_ready(fwd(kparams, x))
    y_ref = jax.block_until_ready(reference_forward(params, x))

    assert y.shape == (BATCH, SEQ, DIM)
    max_err = float(jnp.max(jnp.abs(y - y_ref)))
    assert jnp.allclose(y, y_ref, rtol=1e-4, atol=1e-4), max_err
    print("KERNEL_OK")
</pallas_src>

<mosaic_0001>
module attributes {stable_mosaic.version = 11 : i64} {
  func.func @_fused_attn_kernel(%arg0: memref<32x32xf32, #tpu.memory_space<vmem>>, %arg1: memref<4x32x16xf32, #tpu.memory_space<vmem>>, %arg2: memref<4x32x32xf32, #tpu.memory_space<vmem>>, %arg3: memref<4x32x32xf32, #tpu.memory_space<vmem>>, %arg4: memref<1x32xf32, #tpu.memory_space<vmem>>, %arg5: memref<32x32xf32, #tpu.memory_space<vmem>>) attributes {dimension_semantics = [], scalar_prefetch = 0 : i64, scratch_operands = 0 : i64, tpu.core_type = #tpu.core_type<tc>} {
    %c0 = arith.constant 0 : index
    %c0_0 = arith.constant 0 : index
    %0 = vector.load %arg0[%c0, %c0_0] : memref<32x32xf32, #tpu.memory_space<vmem>>, vector<32x32xf32>
    %1 = vector.shape_cast %0 : vector<32x32xf32> to vector<1x32x32xf32>
    %2 = vector.shape_cast %1 : vector<1x32x32xf32> to vector<1x32x32xf32>
    %3 = vector.broadcast %2 : vector<1x32x32xf32> to vector<4x32x32xf32>
    %c0_1 = arith.constant 0 : index
    %c0_2 = arith.constant 0 : index
    %c0_3 = arith.constant 0 : index
    %4 = vector.load %arg1[%c0_1, %c0_2, %c0_3] : memref<4x32x16xf32, #tpu.memory_space<vmem>>, vector<4x32x16xf32>
    %cst = arith.constant dense<0.000000e+00> : vector<4x32x16xf32>
    %5 = tpu.matmul %3, %4, %cst {dimension_numbers = #tpu.dot_dimension_numbers<[2], [1], [1], [2], [0, 0, 0, 1, 1, 2], [0], [0]>} : vector<4x32x32xf32>, vector<4x32x16xf32>, vector<4x32x16xf32> -> vector<4x32x16xf32>
    %6 = vector.extract_strided_slice %5 {offsets = [0, 0, 0], sizes = [4, 32, 8], strides = [1, 1, 1]} : vector<4x32x16xf32> to vector<4x32x8xf32>
    %7 = vector.extract_strided_slice %5 {offsets = [0, 0, 8], sizes = [4, 32, 8], strides = [1, 1, 1]} : vector<4x32x16xf32> to vector<4x32x8xf32>
    %cst_4 = arith.constant dense<0.000000e+00> : vector<4x32x32xf32>
    %8 = tpu.matmul %6, %7, %cst_4 {dimension_numbers = #tpu.dot_dimension_numbers<[2], [2], [1], [1], [0, 0, 0, 1, 1, 1], [0], [0]>} : vector<4x32x8xf32>, vector<4x32x8xf32>, vector<4x32x32xf32> -> vector<4x32x32xf32>
    %c0_5 = arith.constant 0 : index
    %c0_6 = arith.constant 0 : index
    %c0_7 = arith.constant 0 : index
    %9 = vector.load %arg3[%c0_5, %c0_6, %c0_7] : memref<4x32x32xf32, #tpu.memory_space<vmem>>, vector<4x32x32xf32>
    %10 = arith.addf %8, %9 : vector<4x32x32xf32>
    %cst_8 = arith.constant dense<0xFF800000> : vector<4x32xf32>
    %11 = vector.multi_reduction <maximumf>, %10, %cst_8 [2] : vector<4x32x32xf32> to vector<4x32xf32>
    %12 = vector.shape_cast %11 : vector<4x32xf32> to vector<4x32x1xf32>
    %13 = vector.broadcast %12 : vector<4x32x1xf32> to vector<4x32x32xf32>
    %14 = arith.subf %10, %13 : vector<4x32x32xf32>
    %15 = math.exp %14 : vector<4x32x32xf32>
    %cst_9 = arith.constant dense<0.000000e+00> : vector<4x32xf32>
    %16 = vector.multi_reduction <add>, %15, %cst_9 [2] : vector<4x32x32xf32> to vector<4x32xf32>
    %17 = vector.shape_cast %16 : vector<4x32xf32> to vector<4x32x1xf32>
    %18 = vector.broadcast %17 : vector<4x32x1xf32> to vector<4x32x32xf32>
    %19 = arith.divf %15, %18 : vector<4x32x32xf32>
    %c0_10 = arith.constant 0 : index
    %c0_11 = arith.constant 0 : index
    %c0_12 = arith.constant 0 : index
    %20 = vector.load %arg2[%c0_10, %c0_11, %c0_12] : memref<4x32x32xf32, #tpu.memory_space<vmem>>, vector<4x32x32xf32>
    %cst_13 = arith.constant dense<0.000000e+00> : vector<4x32x32xf32>
    %21 = tpu.matmul %3, %20, %cst_13 {dimension_numbers = #tpu.dot_dimension_numbers<[2], [1], [1], [2], [0, 0, 0, 1, 1, 2], [0], [0]>} : vector<4x32x32xf32>, vector<4x32x32xf32>, vector<4x32x32xf32> -> vector<4x32x32xf32>
    %cst_14 = arith.constant dense<0.000000e+00> : vector<4x32x32xf32>
    %22 = tpu.matmul %19, %21, %cst_14 {dimension_numbers = #tpu.dot_dimension_numbers<[2], [1], [1], [2], [0, 0, 0, 1, 1, 2], [0], [0]>} : vector<4x32x32xf32>, vector<4x32x32xf32>, vector<4x32x32xf32> -> vector<4x32x32xf32>
    %23 = vector.extract_strided_slice %22 {offsets = [0, 0, 0], sizes = [1, 32, 32], strides = [1, 1, 1]} : vector<4x32x32xf32> to vector<1x32x32xf32>
    %24 = vector.shape_cast %23 : vector<1x32x32xf32> to vector<32x32xf32>
    %25 = vector.extract_strided_slice %22 {offsets = [1, 0, 0], sizes = [1, 32, 32], strides = [1, 1, 1]} : vector<4x32x32xf32> to vector<1x32x32xf32>
    %26 = vector.shape_cast %25 : vector<1x32x32xf32> to vector<32x32xf32>
    %27 = arith.addf %24, %26 : vector<32x32xf32>
    %28 = vector.extract_strided_slice %22 {offsets = [2, 0, 0], sizes = [1, 32, 32], strides = [1, 1, 1]} : vector<4x32x32xf32> to vector<1x32x32xf32>
    %29 = vector.shape_cast %28 : vector<1x32x32xf32> to vector<32x32xf32>
    %30 = arith.addf %27, %29 : vector<32x32xf32>
    %31 = vector.extract_strided_slice %22 {offsets = [3, 0, 0], sizes = [1, 32, 32], strides = [1, 1, 1]} : vector<4x32x32xf32> to vector<1x32x32xf32>
    %32 = vector.shape_cast %31 : vector<1x32x32xf32> to vector<32x32xf32>
    %33 = arith.addf %30, %32 : vector<32x32xf32>
    %c0_15 = arith.constant 0 : index
    %c0_16 = arith.constant 0 : index
    %34 = vector.load %arg4[%c0_15, %c0_16] : memref<1x32xf32, #tpu.memory_space<vmem>>, vector<1x32xf32>
    %35 = vector.broadcast %34 : vector<1x32xf32> to vector<32x32xf32>
    %36 = arith.addf %33, %35 : vector<32x32xf32>
    %c0_17 = arith.constant 0 : index
    %c0_18 = arith.constant 0 : index
    %37 = vector.load %arg5[%c0_17, %c0_18] : memref<32x32xf32, #tpu.memory_space<vmem>>, vector<32x32xf32>
    tpu.vector_store %arg5[%c0_17, %c0_18], %36 {strides = array<i32>} : memref<32x32xf32, #tpu.memory_space<vmem>>, vector<32x32xf32>,
    return
  }
}

</mosaic_0001>

<llo_original>
// kernel: sparse_attention_forward.1
$region0: #{sparse_attention_forward.1}
  #allocation0 [shape = 'u32[]', space=smem, size = 0x4, offset = 0x4, fixed_abs, tag = 'smem constant byte address 0x4 - core index']
  #allocation1 [shape = 'u32[72,128]{1,0:T(1,128)}', space=vmem, size = 0x9000, scoped, tag = 'internal scratch']
  %s0 = inlined_call_operand.vmem [shape: f32[32,32], index: 0, kind: input, shape index: {}]
  %s1 = inlined_call_operand.vmem [shape: f32[4,32,16], index: 1, kind: input, shape index: {}]
  %s2 = inlined_call_operand.vmem [shape: f32[4,32,32], index: 2, kind: input, shape index: {}]
  %s3 = inlined_call_operand.hbm [shape: f32[4,32,32], index: 3, kind: input, shape index: {}]
  %s4 = inlined_call_operand.vmem [shape: f32[1,32], index: 4, kind: input, shape index: {}]
  %s5 = inlined_call_operand.hbm [shape: f32[32,32], index: 5, kind: output, shape index: {}]
  %s6 = sld [smem:[#allocation0]]
  $region34: #{sparse_attention_forward.1} parent=0
    _
  %s8 = ssub.s32 1, %s6
  %s9 = scalar_select 0, %s8, %s6
  $region1: #{sparse_attention_forward.1} parent=0
    #allocation2 [shape = 'u8[65536]{0}', space=vmem, size = 0x10000, scoped, tag = 'input window, operand 3, single buffered']
    #allocation3 [shape = 's32[1]{0}', space=sflag, size = 0x4, scoped, tag = 'scoped memory for sparse_attention_forward.1']
    #allocation4 [shape = 's32[1]{0}', space=sflag, size = 0x4, scoped, tag = 'scoped memory for sparse_attention_forward.1']
    #allocation5 [shape = 'u8[16384]{0}', space=vmem, size = 0x4000, scoped, tag = 'output window, operand 0, single buffered']
    %10 = vsyncpa [#allocation3], 0
    %11 = vsyncpa [#allocation4], 0
    // Predicated region
    $region2: #{sparse_attention_forward.1} parent=1 // pred_check
      _
    $region3: #{sparse_attention_forward.1} parent=1 // pred_check_branch
      %13 = sbr.rel (0) target = $region5
    $region4: #{sparse_attention_forward.1} parent=1 // pred_region
      _
    $region5: #{sparse_attention_forward.1} parent=1 // pred_fallthru
      _
    // Predicated region
    $region6: #{sparse_attention_forward.1} parent=1 // pred_check
      _
    $region7: #{sparse_attention_forward.1} parent=1 // pred_check_branch
      %15 = sbr.rel (0) target = $region9
    $region8: #{sparse_attention_forward.1} parent=1 // pred_region
      _
    $region9: #{sparse_attention_forward.1} parent=1 // pred_fallthru
      _
    // Predicated region
    $region10: #{sparse_attention_forward.1} parent=1 // pred_check
      _
    $region11: #{sparse_attention_forward.1} parent=1 // pred_check_branch
      %17 = sbr.rel (0) target = $region13
    $region12: #{sparse_attention_forward.1} parent=1 // pred_region
      _
    $region13: #{sparse_attention_forward.1} parent=1 // pred_fallthru
      _
    // Predicated region
    $region14: #{sparse_attention_forward.1} parent=1 // pred_check
      _
    $region15: #{sparse_attention_forward.1} parent=1 // pred_check_branch
      %19 = sbr.rel (0) target = $region17
    $region16: #{sparse_attention_forward.1} parent=1 // pred_region
      %21 = vsyncadd [#allocation3], 0
      %s22 = sshll.u32 %s3, 4
      %s23 = int_to_ptr.hbm [resolvable:$true] %s22
      %s24 = sshll.u32 [#allocation2], 4
      %s25 = int_to_ptr.vmem [resolvable:$true] %s24
      %30 = dma.hbm_to_vmem [thread:$0]  %s23, 2048, %s25, [#allocation3], 128, 128, 8
    $region17: #{sparse_attention_forward.1} parent=1 // pred_fallthru
      _
    // Predicated region
    $region18: #{sparse_attention_forward.1} parent=1 // pred_check
      _
    $region19: #{sparse_attention_forward.1} parent=1 // pred_check_branch
      %32 = sbr.rel (0) target = $region21
    $region20: #{sparse_attention_forward.1} parent=1 // pred_region
      _
    $region21: #{sparse_attention_forward.1} parent=1 // pred_fallthru
      _
    // Predicated region
    $region22: #{sparse_attention_forward.1} parent=1 // pred_check
      _
    $region23: #{sparse_attention_forward.1} parent=1 // pred_check_branch
      %34 = sbr.rel (0) target = $region25
    $region24: #{sparse_attention_forward.1} parent=1 // pred_region
      %36 = dma.done [#allocation3], 2048
    $region25: #{sparse_attention_forward.1} parent=1 // pred_fallthru
      _
    %v37 = vld [vmem:[%s0] sm:$0xff]
    %v38 = vld [vmem:[%s0 + $0x8] sm:$0xff]
    %v39 = vld [vmem:[%s0 + $0x10] sm:$0xff]
    %v40 = vld [vmem:[%s0 + $0x18] sm:$0xff]
    %v41 = vld [vmem:[%s1] sm:$0xff]
    %v42 = vld [vmem:[%s1 + $0x8] sm:$0xff]
    %v43 = vld [vmem:[%s1 + $0x10] sm:$0xff]
    %v44 = vld [vmem:[%s1 + $0x18] sm:$0xff]
    %v45 = vld [vmem:[%s1 + $0x20] sm:$0xff]
    %v46 = vld [vmem:[%s1 + $0x28] sm:$0xff]
    %v47 = vld [vmem:[%s1 + $0x30] sm:$0xff]
    %v48 = vld [vmem:[%s1 + $0x38] sm:$0xff]
    %v49 = vld [vmem:[%s1 + $0x40] sm:$0xff]
    %v50 = vld [vmem:[%s1 + $0x48] sm:$0xff]
    %v51 = vld [vmem:[%s1 + $0x50] sm:$0xff]
    %v52 = vld [vmem:[%s1 + $0x58] sm:$0xff]
    %v53 = vld [vmem:[%s1 + $0x60] sm:$0xff]
    %v54 = vld [vmem:[%s1 + $0x68] sm:$0xff]
    %v55 = vld [vmem:[%s1 + $0x70] sm:$0xff]
    %v56 = vld [vmem:[%s1 + $0x78] sm:$0xff]
    %vm57 = vcmask 261120
    %v59 = vsel %vm57, %v37, 0
    %v62 = vsel %vm57, %v38, 0
    %v65 = vsel %vm57, %v39, 0
    %v68 = vsel %vm57, %v40, 0
    %70 = vmatpush.msra.mxu0 0.0
    %71 = vmatpush.msra.mxu0 0.0
    %72 = vmatpush.msra.mxu0 0.0
    %73 = vmatpush.msra.mxu0 0.0
    %74 = vmatpush.msra.mxu0 0.0
    %75 = vmatpush.msra.mxu0 0.0
    %76 = vmatpush.msra.mxu0 0.0
    %77 = vmatpush.msra.mxu0 0.0
    %78 = vmatpush.msra.mxu0 0.0
    %79 = vmatpush.msra.mxu0 0.0
    %80 = vmatpush.msra.mxu0 0.0
    %81 = vmatpush.msra.mxu0 0.0
    %82 = vmatpush.msra.mxu0 %v44
    %83 = vmatpush.msra.mxu0 %v43
    %84 = vmatpush.msra.mxu0 %v42
    %85 = vmatpush.msra.mxu0 %v41
    %86 = vmatmul.f32.gmra.mxu0 %v59
    %v87 = vpop.f32.mrf.mxu0
    %v88 = vadd.f32 0.0, %v87
    %89 = vmatmul.f32.gmra.mxu0 %v62
    %v90 = vpop.f32.mrf.mxu0
    %v91 = vadd.f32 0.0, %v90
    %92 = vmatmul.f32.gmra.mxu0 %v65
    %v93 = vpop.f32.mrf.mxu0
    %v94 = vadd.f32 0.0, %v93
    %95 = vmatmul.f32.gmra.mxu0 %v68
    %v96 = vpop.f32.mrf.mxu0
    %v97 = vadd.f32 0.0, %v96
    %98 = vdwg.mxu0
    %99 = vmatpush.msra.mxu0 0.0
    %100 = vmatpush.msra.mxu0 0.0
    %101 = vmatpush.msra.mxu0 0.0
    %102 = vmatpush.msra.mxu0 0.0
    %103 = vmatpush.msra.mxu0 0.0
    %104 = vmatpush.msra.mxu0 0.0
    %105 = vmatpush.msra.mxu0 0.0
    %106 = vmatpush.msra.mxu0 0.0
    %107 = vmatpush.msra.mxu0 0.0
    %108 = vmatpush.msra.mxu0 0.0
    %109 = vmatpush.msra.mxu0 0.0
    %110 = vmatpush.msra.mxu0 0.0
    %111 = vmatpush.msra.mxu0 %v48
    %112 = vmatpush.msra.mxu0 %v47
    %113 = vmatpush.msra.mxu0 %v46
    %114 = vmatpush.msra.mxu0 %v45
    %115 = vmatmul.f32.gmra.mxu0 %v59
    %v116 = vpop.f32.mrf.mxu0
    %v117 = vadd.f32 0.0, %v116
    %118 = vmatmul.f32.gmra.mxu0 %v62
    %v119 = vpop.f32.mrf.mxu0
    %v120 = vadd.f32 0.0, %v119
    %121 = vmatmul.f32.gmra.mxu0 %v65
    %v122 = vpop.f32.mrf.mxu0
    %v123 = vadd.f32 0.0, %v122
    %124 = vmatmul.f32.gmra.mxu0 %v68
    %v125 = vpop.f32.mrf.mxu0
    %v126 = vadd.f32 0.0, %v125
    %127 = vdwg.mxu0
    %128 = vmatpush.msra.mxu0 0.0
    %129 = vmatpush.msra.mxu0 0.0
    %130 = vmatpush.msra.mxu0 0.0
    %131 = vmatpush.msra.mxu0 0.0
    %132 = vmatpush.msra.mxu0 0.0
    %133 = vmatpush.msra.mxu0 0.0
    %134 = vmatpush.msra.mxu0 0.0
    %135 = vmatpush.msra.mxu0 0.0
    %136 = vmatpush.msra.mxu0 0.0
    %137 = vmatpush.msra.mxu0 0.0
    %138 = vmatpush.msra.mxu0 0.0
    %139 = vmatpush.msra.mxu0 0.0
    %140 = vmatpush.msra.mxu0 %v52
    %141 = vmatpush.msra.mxu0 %v51
    %142 = vmatpush.msra.mxu0 %v50
    %143 = vmatpush.msra.mxu0 %v49
    %144 = vmatmul.f32.gmra.mxu0 %v59
    %v145 = vpop.f32.mrf.mxu0
    %v146 = vadd.f32 0.0, %v145
    %147 = vmatmul.f32.gmra.mxu0 %v62
    %v148 = vpop.f32.mrf.mxu0
    %v149 = vadd.f32 0.0, %v148
    %150 = vmatmul.f32.gmra.mxu0 %v65
    %v151 = vpop.f32.mrf.mxu0
    %v152 = vadd.f32 0.0, %v151
    %153 = vmatmul.f32.gmra.mxu0 %v68
    %v154 = vpop.f32.mrf.mxu0
    %v155 = vadd.f32 0.0, %v154
    %156 = vdwg.mxu0
    %157 = vmatpush.msra.mxu0 0.0
    %158 = vmatpush.msra.mxu0 0.0
    %159 = vmatpush.msra.mxu0 0.0
    %160 = vmatpush.msra.mxu0 0.0
    %161 = vmatpush.msra.mxu0 0.0
    %162 = vmatpush.msra.mxu0 0.0
    %163 = vmatpush.msra.mxu0 0.0
    %164 = vmatpush.msra.mxu0 0.0
    %165 = vmatpush.msra.mxu0 0.0
    %166 = vmatpush.msra.mxu0 0.0
    %167 = vmatpush.msra.mxu0 0.0
    %168 = vmatpush.msra.mxu0 0.0
    %169 = vmatpush.msra.mxu0 %v56
    %170 = vmatpush.msra.mxu0 %v55
    %171 = vmatpush.msra.mxu0 %v54
    %172 = vmatpush.msra.mxu0 %v53
    %173 = vmatmul.f32.gmra.mxu0 %v59
    %v174 = vpop.f32.mrf.mxu0
    %v175 = vadd.f32 0.0, %v174
    %176 = vmatmul.f32.gmra.mxu0 %v62
    %v177 = vpop.f32.mrf.mxu0
    %v178 = vadd.f32 0.0, %v177
    %179 = vmatmul.f32.gmra.mxu0 %v65
    %v180 = vpop.f32.mrf.mxu0
    %v181 = vadd.f32 0.0, %v180
    %182 = vmatmul.f32.gmra.mxu0 %v68
    %v183 = vpop.f32.mrf.mxu0
    %v184 = vadd.f32 0.0, %v183
    %185 = vdwg.mxu0
    %v186 = vld [vmem:[#allocation2] sm:$0xff]
    %v187 = vld [vmem:[#allocation2 + $0x8] sm:$0xff]
    %v188 = vld [vmem:[#allocation2 + $0x10] sm:$0xff]
    %v189 = vld [vmem:[#allocation2 + $0x18] sm:$0xff]
    %v190 = vld [vmem:[#allocation2 + $0x20] sm:$0xff]
    %v191 = vld [vmem:[#allocation2 + $0x28] sm:$0xff]
    %v192 = vld [vmem:[#allocation2 + $0x30] sm:$0xff]
    %v193 = vld [vmem:[#allocation2 + $0x38] sm:$0xff]
    %v194 = vld [vmem:[#allocation2 + $0x40] sm:$0xff]
    %v195 = vld [vmem:[#allocation2 + $0x48] sm:$0xff]
    %v196 = vld [vmem:[#allocation2 + $0x50] sm:$0xff]
    %v197 = vld [vmem:[#allocation2 + $0x58] sm:$0xff]
    %v198 = vld [vmem:[#allocation2 + $0x60] sm:$0xff]
    %v199 = vld [vmem:[#allocation2 + $0x68] sm:$0xff]
    %v200 = vld [vmem:[#allocation2 + $0x70] sm:$0xff]
    %v201 = vld [vmem:[#allocation2 + $0x78] sm:$0xff]
    %206 = vrot.lane.b32.xlu0 %v88, 120
    %v207 = vpop.permute.xlu0 %206
    %208 = vrot.lane.b32.xlu0 %v91, 120
    %v209 = vpop.permute.xlu0 %208
    %210 = vrot.lane.b32.xlu0 %v94, 120
    %v211 = vpop.permute.xlu0 %210
    %212 = vrot.lane.b32.xlu0 %v97, 120
    %v213 = vpop.permute.xlu0 %212
    %vm214 = vcmask 64512
    %v215 = vsel %vm214, %v88, 0
    %v217 = vsel %vm214, %v91, 0
    %v219 = vsel %vm214, %v94, 0
    %v221 = vsel %vm214, %v97, 0
    %v223 = vsel %vm214, %v207, 0
    %v225 = vsel %vm214, %v209, 0
    %v227 = vsel %vm214, %v211, 0
    %v229 = vsel %vm214, %v213, 0
    %231 = vmatpush.xpose.msra.mxu0 0.0
    %232 = vmatpush.xpose.msra.mxu0 0.0
    %233 = vmatpush.xpose.msra.mxu0 0.0
    %234 = vmatpush.xpose.msra.mxu0 0.0
    %235 = vmatpush.xpose.msra.mxu0 0.0
    %236 = vmatpush.xpose.msra.mxu0 0.0
    %237 = vmatpush.xpose.msra.mxu0 0.0
    %238 = vmatpush.xpose.msra.mxu0 0.0
    %239 = vmatpush.xpose.msra.mxu0 0.0
    %240 = vmatpush.xpose.msra.mxu0 0.0
    %241 = vmatpush.xpose.msra.mxu0 0.0
    %242 = vmatpush.xpose.msra.mxu0 0.0
    %243 = vmatpush.xpose.msra.mxu0 %v229
    %244 = vmatpush.xpose.msra.mxu0 %v227
    %245 = vmatpush.xpose.msra.mxu0 %v225
    %246 = vmatpush.xpose.msra.mxu0 %v223
    %247 = vmatmul.f32.gmra.mxu0 %v215
    %v248 = vpop.f32.mrf.mxu0
    %v249 = vadd.f32 %v186, %v248
    %250 = vmatmul.f32.gmra.mxu0 %v217
    %v251 = vpop.f32.mrf.mxu0
    %v252 = vadd.f32 %v187, %v251
    %253 = vmatmul.f32.gmra.mxu0 %v219
    %v254 = vpop.f32.mrf.mxu0
    %v255 = vadd.f32 %v188, %v254
    %256 = vmatmul.f32.gmra.mxu0 %v221
    %v257 = vpop.f32.mrf.mxu0
    %v258 = vadd.f32 %v189, %v257
    %259 = vdwg.mxu0
    %264 = vrot.lane.b32.xlu0 %v117, 120
    %v265 = vpop.permute.xlu0 %264
    %266 = vrot.lane.b32.xlu0 %v120, 120
    %v267 = vpop.permute.xlu0 %266
    %268 = vrot.lane.b32.xlu0 %v123, 120
    %v269 = vpop.permute.xlu0 %268
    %270 = vrot.lane.b32.xlu0 %v126, 120
    %v271 = vpop.permute.xlu0 %270
    %v272 = vsel %vm214, %v117, 0
    %v274 = vsel %vm214, %v120, 0
    %v276 = vsel %vm214, %v123, 0
    %v278 = vsel %vm214, %v126, 0
    %v280 = vsel %vm214, %v265, 0
    %v282 = vsel %vm214, %v267, 0
    %v284 = vsel %vm214, %v269, 0
    %v286 = vsel %vm214, %v271, 0
    %288 = vmatpush.xpose.msra.mxu0 0.0
    %289 = vmatpush.xpose.msra.mxu0 0.0
    %290 = vmatpush.xpose.msra.mxu0 0.0
    %291 = vmatpush.xpose.msra.mxu0 0.0
    %292 = vmatpush.xpose.msra.mxu0 0.0
    %293 = vmatpush.xpose.msra.mxu0 0.0
    %294 = vmatpush.xpose.msra.mxu0 0.0
    %295 = vmatpush.xpose.msra.mxu0 0.0
    %296 = vmatpush.xpose.msra.mxu0 0.0
    %297 = vmatpush.xpose.msra.mxu0 0.0
    %298 = vmatpush.xpose.msra.mxu0 0.0
    %299 = vmatpush.xpose.msra.mxu0 0.0
    %300 = vmatpush.xpose.msra.mxu0 %v286
    %301 = vmatpush.xpose.msra.mxu0 %v284
    %302 = vmatpush.xpose.msra.mxu0 %v282
    %303 = vmatpush.xpose.msra.mxu0 %v280
    %304 = vmatmul.f32.gmra.mxu0 %v272
    %v305 = vpop.f32.mrf.mxu0
    %v306 = vadd.f32 %v190, %v305
    %307 = vmatmul.f32.gmra.mxu0 %v274
    %v308 = vpop.f32.mrf.mxu0
    %v309 = vadd.f32 %v191, %v308
    %310 = vmatmul.f32.gmra.mxu0 %v276
    %v311 = vpop.f32.mrf.mxu0
    %v312 = vadd.f32 %v192, %v311
    %313 = vmatmul.f32.gmra.mxu0 %v278
    %v314 = vpop.f32.mrf.mxu0
    %v315 = vadd.f32 %v193, %v314
    %316 = vdwg.mxu0
    %321 = vrot.lane.b32.xlu0 %v146, 120
    %v322 = vpop.permute.xlu0 %321
    %323 = vrot.lane.b32.xlu0 %v149, 120
    %v324 = vpop.permute.xlu0 %323
    %325 = vrot.lane.b32.xlu0 %v152, 120
    %v326 = vpop.permute.xlu0 %325
    %327 = vrot.lane.b32.xlu0 %v155, 120
    %v328 = vpop.permute.xlu0 %327
    %v329 = vsel %vm214, %v146, 0
    %v331 = vsel %vm214, %v149, 0
    %v333 = vsel %vm214, %v152, 0
    %v335 = vsel %vm214, %v155, 0
    %v337 = vsel %vm214, %v322, 0
    %v339 = vsel %vm214, %v324, 0
    %v341 = vsel %vm214, %v326, 0
    %v343 = vsel %vm214, %v328, 0
    %345 = vmatpush.xpose.msra.mxu0 0.0
    %346 = vmatpush.xpose.msra.mxu0 0.0
    %347 = vmatpush.xpose.msra.mxu0 0.0
    %348 = vmatpush.xpose.msra.mxu0 0.0
    %349 = vmatpush.xpose.msra.mxu0 0.0
    %350 = vmatpush.xpose.msra.mxu0 0.0
    %351 = vmatpush.xpose.msra.mxu0 0.0
    %352 = vmatpush.xpose.msra.mxu0 0.0
    %353 = vmatpush.xpose.msra.mxu0 0.0
    %354 = vmatpush.xpose.msra.mxu0 0.0
    %355 = vmatpush.xpose.msra.mxu0 0.0
    %356 = vmatpush.xpose.msra.mxu0 0.0
    %357 = vmatpush.xpose.msra.mxu0 %v343
    %358 = vmatpush.xpose.msra.mxu0 %v341
    %359 = vmatpush.xpose.msra.mxu0 %v339
    %360 = vmatpush.xpose.msra.mxu0 %v337
    %361 = vmatmul.f32.gmra.mxu0 %v329
    %v362 = vpop.f32.mrf.mxu0
    %v363 = vadd.f32 %v194, %v362
    %364 = vmatmul.f32.gmra.mxu0 %v331
    %v365 = vpop.f32.mrf.mxu0
    %v366 = vadd.f32 %v195, %v365
    %367 = vmatmul.f32.gmra.mxu0 %v333
    %v368 = vpop.f32.mrf.mxu0
    %v369 = vadd.f32 %v196, %v368
    %370 = vmatmul.f32.gmra.mxu0 %v335
    %v371 = vpop.f32.mrf.mxu0
    %v372 = vadd.f32 %v197, %v371
    %373 = vdwg.mxu0
    %378 = vrot.lane.b32.xlu0 %v175, 120
    %v379 = vpop.permute.xlu0 %378
    %380 = vrot.lane.b32.xlu0 %v178, 120
    %v381 = vpop.permute.xlu0 %380
    %382 = vrot.lane.b32.xlu0 %v181, 120
    %v383 = vpop.permute.xlu0 %382
    %384 = vrot.lane.b32.xlu0 %v184, 120
    %v385 = vpop.permute.xlu0 %384
    %v386 = vsel %vm214, %v175, 0
    %v388 = vsel %vm214, %v178, 0
    %v390 = vsel %vm214, %v181, 0
    %v392 = vsel %vm214, %v184, 0
    %v394 = vsel %vm214, %v379, 0
    %v396 = vsel %vm214, %v381, 0
    %v398 = vsel %vm214, %v383, 0
    %v400 = vsel %vm214, %v385, 0
    %402 = vmatpush.xpose.msra.mxu0 0.0
    %403 = vmatpush.xpose.msra.mxu0 0.0
    %404 = vmatpush.xpose.msra.mxu0 0.0
    %405 = vmatpush.xpose.msra.mxu0 0.0
    %406 = vmatpush.xpose.msra.mxu0 0.0
    %407 = vmatpush.xpose.msra.mxu0 0.0
    %408 = vmatpush.xpose.msra.mxu0 0.0
    %409 = vmatpush.xpose.msra.mxu0 0.0
    %410 = vmatpush.xpose.msra.mxu0 0.0
    %411 = vmatpush.xpose.msra.mxu0 0.0
    %412 = vmatpush.xpose.msra.mxu0 0.0
    %413 = vmatpush.xpose.msra.mxu0 0.0
    %414 = vmatpush.xpose.msra.mxu0 %v400
    %415 = vmatpush.xpose.msra.mxu0 %v398
    %416 = vmatpush.xpose.msra.mxu0 %v396
    %417 = vmatpush.xpose.msra.mxu0 %v394
    %418 = vmatmul.f32.gmra.mxu0 %v386
    %v419 = vpop.f32.mrf.mxu0
    %v420 = vadd.f32 %v198, %v419
    %421 = vmatmul.f32.gmra.mxu0 %v388
    %v422 = vpop.f32.mrf.mxu0
    %v423 = vadd.f32 %v199, %v422
    %424 = vmatmul.f32.gmra.mxu0 %v390
    %v425 = vpop.f32.mrf.mxu0
    %v426 = vadd.f32 %v200, %v425
    %427 = vmatmul.f32.gmra.mxu0 %v392
    %v428 = vpop.f32.mrf.mxu0
    %v429 = vadd.f32 %v201, %v428
    %430 = vdwg.mxu0
    %v431 = vsel %vm57, %v249, -inf
    %432 = vmax.xlane.f32.xlu0 %v431
    %v433 = vpop.xlane.xlu0 %432
    %v434 = vsel %vm57, %v252, -inf
    %435 = vmax.xlane.f32.xlu0 %v434
    %v436 = vpop.xlane.xlu0 %435
    %v437 = vsel %vm57, %v255, -inf
    %438 = vmax.xlane.f32.xlu0 %v437
    %v439 = vpop.xlane.xlu0 %438
    %v440 = vsel %vm57, %v258, -inf
    %441 = vmax.xlane.f32.xlu0 %v440
    %v442 = vpop.xlane.xlu0 %441
    %v443 = vsel %vm57, %v306, -inf
    %444 = vmax.xlane.f32.xlu0 %v443
    %v445 = vpop.xlane.xlu0 %444
    %v446 = vsel %vm57, %v309, -inf
    %447 = vmax.xlane.f32.xlu0 %v446
    %v448 = vpop.xlane.xlu0 %447
    %v449 = vsel %vm57, %v312, -inf
    %450 = vmax.xlane.f32.xlu0 %v449
    %v451 = vpop.xlane.xlu0 %450
    %v452 = vsel %vm57, %v315, -inf
    %453 = vmax.xlane.f32.xlu0 %v452
    %v454 = vpop.xlane.xlu0 %453
    %v455 = vsel %vm57, %v363, -inf
    %456 = vmax.xlane.f32.xlu0 %v455
    %v457 = vpop.xlane.xlu0 %456
    %v458 = vsel %vm57, %v366, -inf
    %459 = vmax.xlane.f32.xlu0 %v458
    %v460 = vpop.xlane.xlu0 %459
    %v461 = vsel %vm57, %v369, -inf
    %462 = vmax.xlane.f32.xlu0 %v461
    %v463 = vpop.xlane.xlu0 %462
    %v464 = vsel %vm57, %v372, -inf
    %465 = vmax.xlane.f32.xlu0 %v464
    %v466 = vpop.xlane.xlu0 %465
    %v467 = vsel %vm57, %v420, -inf
    %468 = vmax.xlane.f32.xlu0 %v467
    %v469 = vpop.xlane.xlu0 %468
    %v470 = vsel %vm57, %v423, -inf
    %471 = vmax.xlane.f32.xlu0 %v470
    %v472 = vpop.xlane.xlu0 %471
    %v473 = vsel %vm57, %v426, -inf
    %474 = vmax.xlane.f32.xlu0 %v473
    %v475 = vpop.xlane.xlu0 %474
    %v476 = vsel %vm57, %v429, -inf
    %477 = vmax.xlane.f32.xlu0 %v476
    %v478 = vpop.xlane.xlu0 %477
    %v479 = vsub.f32 %v249, %v433
    %v480 = vsub.f32 %v252, %v436
    %v481 = vsub.f32 %v255, %v439
    %v482 = vsub.f32 %v258, %v442
    %v483 = vsub.f32 %v306, %v445
    %v484 = vsub.f32 %v309, %v448
    %v485 = vsub.f32 %v312, %v451
    %v486 = vsub.f32 %v315, %v454
    %v487 = vsub.f32 %v363, %v457
    %v488 = vsub.f32 %v366, %v460
    %v489 = vsub.f32 %v369, %v463
    %v490 = vsub.f32 %v372, %v466
    %v491 = vsub.f32 %v420, %v469
    %v492 = vsub.f32 %v423, %v472
    %v493 = vsub.f32 %v426, %v475
    %v494 = vsub.f32 %v429, %v478
    %v495 = vmul.f32 %v479, 1.442695
    %v496 = vpow.pop %v495
    %v497 = vmul.f32 %v480, 1.442695
    %v498 = vpow.pop %v497
    %v499 = vmul.f32 %v481, 1.442695
    %v500 = vpow.pop %v499
    %v501 = vmul.f32 %v482, 1.442695
    %v502 = vpow.pop %v501
    %v503 = vmul.f32 %v483, 1.442695
    %v504 = vpow.pop %v503
    %v505 = vmul.f32 %v484, 1.442695
    %v506 = vpow.pop %v505
    %v507 = vmul.f32 %v485, 1.442695
    %v508 = vpow.pop %v507
    %v509 = vmul.f32 %v486, 1.442695
    %v510 = vpow.pop %v509
    %v511 = vmul.f32 %v487, 1.442695
    %v512 = vpow.pop %v511
    %v513 = vmul.f32 %v488, 1.442695
    %v514 = vpow.pop %v513
    %v515 = vmul.f32 %v489, 1.442695
    %v516 = vpow.pop %v515
    %v517 = vmul.f32 %v490, 1.442695
    %v518 = vpow.pop %v517
    %v519 = vmul.f32 %v491, 1.442695
    %v520 = vpow.pop %v519
    %v521 = vmul.f32 %v492, 1.442695
    %v522 = vpow.pop %v521
    %v523 = vmul.f32 %v493, 1.442695
    %v524 = vpow.pop %v523
    %v525 = vmul.f32 %v494, 1.442695
    %v526 = vpow.pop %v525
    %v527 = vsel %vm57, %v496, 0.0
    %528 = vadd.xlane.f32.xlu0 %v527
    %v529 = vpop.xlane.xlu0 %528
    %v530 = vsel %vm57, %v498, 0.0
    %531 = vadd.xlane.f32.xlu0 %v530
    %v532 = vpop.xlane.xlu0 %531
    %v533 = vsel %vm57, %v500, 0.0
    %534 = vadd.xlane.f32.xlu0 %v533
    %v535 = vpop.xlane.xlu0 %534
    %v536 = vsel %vm57, %v502, 0.0
    %537 = vadd.xlane.f32.xlu0 %v536
    %v538 = vpop.xlane.xlu0 %537
    %v539 = vsel %vm57, %v504, 0.0
    %540 = vadd.xlane.f32.xlu0 %v539
    %v541 = vpop.xlane.xlu0 %540
    %v542 = vsel %vm57, %v506, 0.0
    %543 = vadd.xlane.f32.xlu0 %v542
    %v544 = vpop.xlane.xlu0 %543
    %v545 = vsel %vm57, %v508, 0.0
    %546 = vadd.xlane.f32.xlu0 %v545
    %v547 = vpop.xlane.xlu0 %546
    %v548 = vsel %vm57, %v510, 0.0
    %549 = vadd.xlane.f32.xlu0 %v548
    %v550 = vpop.xlane.xlu0 %549
    %v551 = vsel %vm57, %v512, 0.0
    %552 = vadd.xlane.f32.xlu0 %v551
    %v553 = vpop.xlane.xlu0 %552
    %v554 = vsel %vm57, %v514, 0.0
    %555 = vadd.xlane.f32.xlu0 %v554
    %v556 = vpop.xlane.xlu0 %555
    %v557 = vsel %vm57, %v516, 0.0
    %558 = vadd.xlane.f32.xlu0 %v557
    %v559 = vpop.xlane.xlu0 %558
    %v560 = vsel %vm57, %v518, 0.0
    %561 = vadd.xlane.f32.xlu0 %v560
    %v562 = vpop.xlane.xlu0 %561
    %v563 = vsel %vm57, %v520, 0.0
    %564 = vadd.xlane.f32.xlu0 %v563
    %v565 = vpop.xlane.xlu0 %564
    %v566 = vsel %vm57, %v522, 0.0
    %567 = vadd.xlane.f32.xlu0 %v566
    %v568 = vpop.xlane.xlu0 %567
    %v569 = vsel %vm57, %v524, 0.0
    %570 = vadd.xlane.f32.xlu0 %v569
    %v571 = vpop.xlane.xlu0 %570
    %v572 = vsel %vm57, %v526, 0.0
    %573 = vadd.xlane.f32.xlu0 %v572
    %v574 = vpop.xlane.xlu0 %573
    %v575 = vrcp.pop %v529
    %v576 = vmul.f32 %v529, %v575
    %v577 = vsub.f32 1.0, %v576
    %v578 = vmul.f32 %v575, %v577
    %v579 = vadd.f32 %v575, %v578
    %vm580 = vweird.f32 %v529
    %vm581 = vweird.f32 %v575
    %vm582 = vmor %vm580, %vm581
    %v583 = vsel %vm582, %v575, %v579
    %v584 = vand.u32 2147483647, %v529
    %vm585 = vcmp.eq.f32.partialorder %v584, 8.507059e+37
    %v586 = vand.u32 %v529, 2147483648
    %v587 = vor.u32 1.1754944e-38, %v586
    %v588 = vsel %vm585, %v587, %v583
    %v589 = vmul.f32 %v496, %v588
    %v590 = vrcp.pop %v532
    %v591 = vmul.f32 %v532, %v590
    %v592 = vsub.f32 1.0, %v591
    %v593 = vmul.f32 %v590, %v592
    %v594 = vadd.f32 %v590, %v593
    %vm595 = vweird.f32 %v532
    %vm596 = vweird.f32 %v590
    %vm597 = vmor %vm595, %vm596
    %v598 = vsel %vm597, %v590, %v594
    %v599 = vand.u32 2147483647, %v532
    %vm600 = vcmp.eq.f32.partialorder %v599, 8.507059e+37
    %v601 = vand.u32 %v532, 2147483648
    %v602 = vor.u32 1.1754944e-38, %v601
    %v603 = vsel %vm600, %v602, %v598
    %v604 = vmul.f32 %v498, %v603
    %v605 = vrcp.pop %v535
    %v606 = vmul.f32 %v535, %v605
    %v607 = vsub.f32 1.0, %v606
    %v608 = vmul.f32 %v605, %v607
    %v609 = vadd.f32 %v605, %v608
    %vm610 = vweird.f32 %v535
    %vm611 = vweird.f32 %v605
    %vm612 = vmor %vm610, %vm611
    %v613 = vsel %vm612, %v605, %v609
    %v614 = vand.u32 2147483647, %v535
    %vm615 = vcmp.eq.f32.partialorder %v614, 8.507059e+37
    %v616 = vand.u32 %v535, 2147483648
    %v617 = vor.u32 1.1754944e-38, %v616
    %v618 = vsel %vm615, %v617, %v613
    %v619 = vmul.f32 %v500, %v618
    %v620 = vrcp.pop %v538
    %v621 = vmul.f32 %v538, %v620
    %v622 = vsub.f32 1.0, %v621
    %v623 = vmul.f32 %v620, %v622
    %v624 = vadd.f32 %v620, %v623
    %vm625 = vweird.f32 %v538
    %vm626 = vweird.f32 %v620
    %vm627 = vmor %vm625, %vm626
    %v628 = vsel %vm627, %v620, %v624
    %v629 = vand.u32 2147483647, %v538
    %vm630 = vcmp.eq.f32.partialorder %v629, 8.507059e+37
    %v631 = vand.u32 %v538, 2147483648
    %v632 = vor.u32 1.1754944e-38, %v631
    %v633 = vsel %vm630, %v632, %v628
    %v634 = vmul.f32 %v502, %v633
    %v635 = vrcp.pop %v541
    %v636 = vmul.f32 %v541, %v635
    %v637 = vsub.f32 1.0, %v636
    %v638 = vmul.f32 %v635, %v637
    %v639 = vadd.f32 %v635, %v638
    %vm640 = vweird.f32 %v541
    %vm641 = vweird.f32 %v635
    %vm642 = vmor %vm640, %vm641
    %v643 = vsel %vm642, %v635, %v639
    %v644 = vand.u32 2147483647, %v541
    %vm645 = vcmp.eq.f32.partialorder %v644, 8.507059e+37
    %v646 = vand.u32 %v541, 2147483648
    %v647 = vor.u32 1.1754944e-38, %v646
    %v648 = vsel %vm645, %v647, %v643
    %v649 = vmul.f32 %v504, %v648
    %v650 = vrcp.pop %v544
    %v651 = vmul.f32 %v544, %v650
    %v652 = vsub.f32 1.0, %v651
    %v653 = vmul.f32 %v650, %v652
    %v654 = vadd.f32 %v650, %v653
    %vm655 = vweird.f32 %v544
    %vm656 = vweird.f32 %v650
    %vm657 = vmor %vm655, %vm656
    %v658 = vsel %vm657, %v650, %v654
    %v659 = vand.u32 2147483647, %v544
    %vm660 = vcmp.eq.f32.partialorder %v659, 8.507059e+37
    %v661 = vand.u32 %v544, 2147483648
    %v662 = vor.u32 1.1754944e-38, %v661
    %v663 = vsel %vm660, %v662, %v658
    %v664 = vmul.f32 %v506, %v663
    %v665 = vrcp.pop %v547
    %v666 = vmul.f32 %v547, %v665
    %v667 = vsub.f32 1.0, %v666
    %v668 = vmul.f32 %v665, %v667
    %v669 = vadd.f32 %v665, %v668
    %vm670 = vweird.f32 %v547
    %vm671 = vweird.f32 %v665
    %vm672 = vmor %vm670, %vm671
    %v673 = vsel %vm672, %v665, %v669
    %v674 = vand.u32 2147483647, %v547
    %vm675 = vcmp.eq.f32.partialorder %v674, 8.507059e+37
    %v676 = vand.u32 %v547, 2147483648
    %v677 = vor.u32 1.1754944e-38, %v676
    %v678 = vsel %vm675, %v677, %v673
    %v679 = vmul.f32 %v508, %v678
    %v680 = vrcp.pop %v550
    %v681 = vmul.f32 %v550, %v680
    %v682 = vsub.f32 1.0, %v681
    %v683 = vmul.f32 %v680, %v682
    %v684 = vadd.f32 %v680, %v683
    %vm685 = vweird.f32 %v550
    %vm686 = vweird.f32 %v680
    %vm687 = vmor %vm685, %vm686
    %v688 = vsel %vm687, %v680, %v684
    %v689 = vand.u32 2147483647, %v550
    %vm690 = vcmp.eq.f32.partialorder %v689, 8.507059e+37
    %v691 = vand.u32 %v550, 2147483648
    %v692 = vor.u32 1.1754944e-38, %v691
    %v693 = vsel %vm690, %v692, %v688
    %v694 = vmul.f32 %v510, %v693
    %v695 = vrcp.pop %v553
    %v696 = vmul.f32 %v553, %v695
    %v697 = vsub.f32 1.0, %v696
    %v698 = vmul.f32 %v695, %v697
    %v699 = vadd.f32 %v695, %v698
    %vm700 = vweird.f32 %v553
    %vm701 = vweird.f32 %v695
    %vm702 = vmor %vm700, %vm701
    %v703 = vsel %vm702, %v695, %v699
    %v704 = vand.u32 2147483647, %v553
    %vm705 = vcmp.eq.f32.partialorder %v704, 8.507059e+37
    %v706 = vand.u32 %v553, 2147483648
    %v707 = vor.u32 1.1754944e-38, %v706
    %v708 = vsel %vm705, %v707, %v703
    %v709 = vmul.f32 %v512, %v708
    %v710 = vrcp.pop %v556
    %v711 = vmul.f32 %v556, %v710
    %v712 = vsub.f32 1.0, %v711
    %v713 = vmul.f32 %v710, %v712
    %v714 = vadd.f32 %v710, %v713
    %vm715 = vweird.f32 %v556
    %vm716 = vweird.f32 %v710
    %vm717 = vmor %vm715, %vm716
    %v718 = vsel %vm717, %v710, %v714
    %v719 = vand.u32 2147483647, %v556
    %vm720 = vcmp.eq.f32.partialorder %v719, 8.507059e+37
    %v721 = vand.u32 %v556, 2147483648
    %v722 = vor.u32 1.1754944e-38, %v721
    %v723 = vsel %vm720, %v722, %v718
    %v724 = vmul.f32 %v514, %v723
    %v725 = vrcp.pop %v559
    %v726 = vmul.f32 %v559, %v725
    %v727 = vsub.f32 1.0, %v726
    %v728 = vmul.f32 %v725, %v727
    %v729 = vadd.f32 %v725, %v728
    %vm730 = vweird.f32 %v559
    %vm731 = vweird.f32 %v725
    %vm732 = vmor %vm730, %vm731
    %v733 = vsel %vm732, %v725, %v729
    %v734 = vand.u32 2147483647, %v559
    %vm735 = vcmp.eq.f32.partialorder %v734, 8.507059e+37
    %v736 = vand.u32 %v559, 2147483648
    %v737 = vor.u32 1.1754944e-38, %v736
    %v738 = vsel %vm735, %v737, %v733
    %v739 = vmul.f32 %v516, %v738
    %v740 = vrcp.pop %v562
    %v741 = vmul.f32 %v562, %v740
    %v742 = vsub.f32 1.0, %v741
    %v743 = vmul.f32 %v740, %v742
    %v744 = vadd.f32 %v740, %v743
    %vm745 = vweird.f32 %v562
    %vm746 = vweird.f32 %v740
    %vm747 = vmor %vm745, %vm746
    %v748 = vsel %vm747, %v740, %v744
    %v749 = vand.u32 2147483647, %v562
    %vm750 = vcmp.eq.f32.partialorder %v749, 8.507059e+37
    %v751 = vand.u32 %v562, 2147483648
    %v752 = vor.u32 1.1754944e-38, %v751
    %v753 = vsel %vm750, %v752, %v748
    %v754 = vmul.f32 %v518, %v753
    %v755 = vrcp.pop %v565
    %v756 = vmul.f32 %v565, %v755
    %v757 = vsub.f32 1.0, %v756
    %v758 = vmul.f32 %v755, %v757
    %v759 = vadd.f32 %v755, %v758
    %vm760 = vweird.f32 %v565
    %vm761 = vweird.f32 %v755
    %vm762 = vmor %vm760, %vm761
    %v763 = vsel %vm762, %v755, %v759
    %v764 = vand.u32 2147483647, %v565
    %vm765 = vcmp.eq.f32.partialorder %v764, 8.507059e+37
    %v766 = vand.u32 %v565, 2147483648
    %v767 = vor.u32 1.1754944e-38, %v766
    %v768 = vsel %vm765, %v767, %v763
    %v769 = vmul.f32 %v520, %v768
    %v770 = vrcp.pop %v568
    %v771 = vmul.f32 %v568, %v770
    %v772 = vsub.f32 1.0, %v771
    %v773 = vmul.f32 %v770, %v772
    %v774 = vadd.f32 %v770, %v773
    %vm775 = vweird.f32 %v568
    %vm776 = vweird.f32 %v770
    %vm777 = vmor %vm775, %vm776
    %v778 = vsel %vm777, %v770, %v774
    %v779 = vand.u32 2147483647, %v568
    %vm780 = vcmp.eq.f32.partialorder %v779, 8.507059e+37
    %v781 = vand.u32 %v568, 2147483648
    %v782 = vor.u32 1.1754944e-38, %v781
    %v783 = vsel %vm780, %v782, %v778
    %v784 = vmul.f32 %v522, %v783
    %v785 = vrcp.pop %v571
    %v786 = vmul.f32 %v571, %v785
    %v787 = vsub.f32 1.0, %v786
    %v788 = vmul.f32 %v785, %v787
    %v789 = vadd.f32 %v785, %v788
    %vm790 = vweird.f32 %v571
    %vm791 = vweird.f32 %v785
    %vm792 = vmor %vm790, %vm791
    %v793 = vsel %vm792, %v785, %v789
    %v794 = vand.u32 2147483647, %v571
    %vm795 = vcmp.eq.f32.partialorder %v794, 8.507059e+37
    %v796 = vand.u32 %v571, 2147483648
    %v797 = vor.u32 1.1754944e-38, %v796
    %v798 = vsel %vm795, %v797, %v793
    %v799 = vmul.f32 %v524, %v798
    %v800 = vrcp.pop %v574
    %v801 = vmul.f32 %v574, %v800
    %v802 = vsub.f32 1.0, %v801
    %v803 = vmul.f32 %v800, %v802
    %v804 = vadd.f32 %v800, %v803
    %vm805 = vweird.f32 %v574
    %vm806 = vweird.f32 %v800
    %vm807 = vmor %vm805, %vm806
    %v808 = vsel %vm807, %v800, %v804
    %v809 = vand.u32 2147483647, %v574
    %vm810 = vcmp.eq.f32.partialorder %v809, 8.507059e+37
    %v811 = vand.u32 %v574, 2147483648
    %v812 = vor.u32 1.1754944e-38, %v811
    %v813 = vsel %vm810, %v812, %v808
    %v814 = vmul.f32 %v526, %v813
    %v815 = vld [vmem:[%s2] sm:$0xff]
    %v816 = vld [vmem:[%s2 + $0x8] sm:$0xff]
    %v817 = vld [vmem:[%s2 + $0x10] sm:$0xff]
    %v818 = vld [vmem:[%s2 + $0x18] sm:$0xff]
    %v819 = vld [vmem:[%s2 + $0x20] sm:$0xff]
    %v820 = vld [vmem:[%s2 + $0x28] sm:$0xff]
    %v821 = vld [vmem:[%s2 + $0x30] sm:$0xff]
    %v822 = vld [vmem:[%s2 + $0x38] sm:$0xff]
    %v823 = vld [vmem:[%s2 + $0x40] sm:$0xff]
    %v824 = vld [vmem:[%s2 + $0x48] sm:$0xff]
    %v825 = vld [vmem:[%s2 + $0x50] sm:$0xff]
    %v826 = vld [vmem:[%s2 + $0x58] sm:$0xff]
    %v827 = vld [vmem:[%s2 + $0x60] sm:$0xff]
    %v828 = vld [vmem:[%s2 + $0x68] sm:$0xff]
    %v829 = vld [vmem:[%s2 + $0x70] sm:$0xff]
    %v830 = vld [vmem:[%s2 + $0x78] sm:$0xff]
    %831 = vmatpush.msra.mxu0 0.0
    %832 = vmatpush.msra.mxu0 0.0
    %833 = vmatpush.msra.mxu0 0.0
    %834 = vmatpush.msra.mxu0 0.0
    %835 = vmatpush.msra.mxu0 0.0
    %836 = vmatpush.msra.mxu0 0.0
    %837 = vmatpush.msra.mxu0 0.0
    %838 = vmatpush.msra.mxu0 0.0
    %839 = vmatpush.msra.mxu0 0.0
    %840 = vmatpush.msra.mxu0 0.0
    %841 = vmatpush.msra.mxu0 0.0
    %842 = vmatpush.msra.mxu0 0.0
    %843 = vmatpush.msra.mxu0 %v818
    %844 = vmatpush.msra.mxu0 %v817
    %845 = vmatpush.msra.mxu0 %v816
    %846 = vmatpush.msra.mxu0 %v815
    %847 = vmatmul.f32.gmra.mxu0 %v59
    %v848 = vpop.f32.mrf.mxu0
    %v849 = vadd.f32 0.0, %v848
    %850 = vmatmul.f32.gmra.mxu0 %v62
    %v851 = vpop.f32.mrf.mxu0
    %v852 = vadd.f32 0.0, %v851
    %853 = vmatmul.f32.gmra.mxu0 %v65
    %v854 = vpop.f32.mrf.mxu0
    %v855 = vadd.f32 0.0, %v854
    %856 = vmatmul.f32.gmra.mxu0 %v68
    %v857 = vpop.f32.mrf.mxu0
    %v858 = vadd.f32 0.0, %v857
    %859 = vdwg.mxu0
    %860 = vmatpush.msra.mxu0 0.0
    %861 = vmatpush.msra.mxu0 0.0
    %862 = vmatpush.msra.mxu0 0.0
    %863 = vmatpush.msra.mxu0 0.0
    %864 = vmatpush.msra.mxu0 0.0
    %865 = vmatpush.msra.mxu0 0.0
    %866 = vmatpush.msra.mxu0 0.0
    %867 = vmatpush.msra.mxu0 0.0
    %868 = vmatpush.msra.mxu0 0.0
    %869 = vmatpush.msra.mxu0 0.0
    %870 = vmatpush.msra.mxu0 0.0
    %871 = vmatpush.msra.mxu0 0.0
    %872 = vmatpush.msra.mxu0 %v822
    %873 = vmatpush.msra.mxu0 %v821
    %874 = vmatpush.msra.mxu0 %v820
    %875 = vmatpush.msra.mxu0 %v819
    %876 = vmatmul.f32.gmra.mxu0 %v59
    %v877 = vpop.f32.mrf.mxu0
    %v878 = vadd.f32 0.0, %v877
    %879 = vmatmul.f32.gmra.mxu0 %v62
    %v880 = vpop.f32.mrf.mxu0
    %v881 = vadd.f32 0.0, %v880
    %882 = vmatmul.f32.gmra.mxu0 %v65
    %v883 = vpop.f32.mrf.mxu0
    %v884 = vadd.f32 0.0, %v883
    %885 = vmatmul.f32.gmra.mxu0 %v68
    %v886 = vpop.f32.mrf.mxu0
    %v887 = vadd.f32 0.0, %v886
    %888 = vdwg.mxu0
    %889 = vmatpush.msra.mxu0 0.0
    %890 = vmatpush.msra.mxu0 0.0
    %891 = vmatpush.msra.mxu0 0.0
    %892 = vmatpush.msra.mxu0 0.0
    %893 = vmatpush.msra.mxu0 0.0
    %894 = vmatpush.msra.mxu0 0.0
    %895 = vmatpush.msra.mxu0 0.0
    %896 = vmatpush.msra.mxu0 0.0
    %897 = vmatpush.msra.mxu0 0.0
    %898 = vmatpush.msra.mxu0 0.0
    %899 = vmatpush.msra.mxu0 0.0
    %900 = vmatpush.msra.mxu0 0.0
    %901 = vmatpush.msra.mxu0 %v826
    %902 = vmatpush.msra.mxu0 %v825
    %903 = vmatpush.msra.mxu0 %v824
    %904 = vmatpush.msra.mxu0 %v823
    %905 = vmatmul.f32.gmra.mxu0 %v59
    %v906 = vpop.f32.mrf.mxu0
    %v907 = vadd.f32 0.0, %v906
    %908 = vmatmul.f32.gmra.mxu0 %v62
    %v909 = vpop.f32.mrf.mxu0
    %v910 = vadd.f32 0.0, %v909
    %911 = vmatmul.f32.gmra.mxu0 %v65
    %v912 = vpop.f32.mrf.mxu0
    %v913 = vadd.f32 0.0, %v912
    %914 = vmatmul.f32.gmra.mxu0 %v68
    %v915 = vpop.f32.mrf.mxu0
    %v916 = vadd.f32 0.0, %v915
    %917 = vdwg.mxu0
    %918 = vmatpush.msra.mxu0 0.0
    %919 = vmatpush.msra.mxu0 0.0
    %920 = vmatpush.msra.mxu0 0.0
    %921 = vmatpush.msra.mxu0 0.0
    %922 = vmatpush.msra.mxu0 0.0
    %923 = vmatpush.msra.mxu0 0.0
    %924 = vmatpush.msra.mxu0 0.0
    %925 = vmatpush.msra.mxu0 0.0
    %926 = vmatpush.msra.mxu0 0.0
    %927 = vmatpush.msra.mxu0 0.0
    %928 = vmatpush.msra.mxu0 0.0
    %929 = vmatpush.msra.mxu0 0.0
    %930 = vmatpush.msra.mxu0 %v830
    %931 = vmatpush.msra.mxu0 %v829
    %932 = vmatpush.msra.mxu0 %v828
    %933 = vmatpush.msra.mxu0 %v827
    %934 = vmatmul.f32.gmra.mxu0 %v59
    %v935 = vpop.f32.mrf.mxu0
    %v936 = vadd.f32 0.0, %v935
    %937 = vmatmul.f32.gmra.mxu0 %v62
    %v938 = vpop.f32.mrf.mxu0
    %v939 = vadd.f32 0.0, %v938
    %940 = vmatmul.f32.gmra.mxu0 %v65
    %v941 = vpop.f32.mrf.mxu0
    %v942 = vadd.f32 0.0, %v941
    %943 = vmatmul.f32.gmra.mxu0 %v68
    %v944 = vpop.f32.mrf.mxu0
    %v945 = vadd.f32 0.0, %v944
    %946 = vdwg.mxu0
    %v948 = vsel %vm57, %v589, 0
    %v951 = vsel %vm57, %v604, 0
    %v954 = vsel %vm57, %v619, 0
    %v957 = vsel %vm57, %v634, 0
    %959 = vmatpush.msra.mxu0 0.0
    %960 = vmatpush.msra.mxu0 0.0
    %961 = vmatpush.msra.mxu0 0.0
    %962 = vmatpush.msra.mxu0 0.0
    %963 = vmatpush.msra.mxu0 0.0
    %964 = vmatpush.msra.mxu0 0.0
    %965 = vmatpush.msra.mxu0 0.0
    %966 = vmatpush.msra.mxu0 0.0
    %967 = vmatpush.msra.mxu0 0.0
    %968 = vmatpush.msra.mxu0 0.0
    %969 = vmatpush.msra.mxu0 0.0
    %970 = vmatpush.msra.mxu0 0.0
    %971 = vmatpush.msra.mxu0 %v858
    %972 = vmatpush.msra.mxu0 %v855
    %973 = vmatpush.msra.mxu0 %v852
    %974 = vmatpush.msra.mxu0 %v849
    %975 = vmatmul.f32.gmra.mxu0 %v948
    %v976 = vpop.f32.mrf.mxu0
    %v977 = vadd.f32 0.0, %v976
    %978 = vmatmul.f32.gmra.mxu0 %v951
    %v979 = vpop.f32.mrf.mxu0
    %v980 = vadd.f32 0.0, %v979
    %981 = vmatmul.f32.gmra.mxu0 %v954
    %v982 = vpop.f32.mrf.mxu0
    %v983 = vadd.f32 0.0, %v982
    %984 = vmatmul.f32.gmra.mxu0 %v957
    %v985 = vpop.f32.mrf.mxu0
    %v986 = vadd.f32 0.0, %v985
    %987 = vdwg.mxu0
    %v989 = vsel %vm57, %v649, 0
    %v992 = vsel %vm57, %v664, 0
    %v995 = vsel %vm57, %v679, 0
    %v998 = vsel %vm57, %v694, 0
    %1000 = vmatpush.msra.mxu0 0.0
    %1001 = vmatpush.msra.mxu0 0.0
    %1002 = vmatpush.msra.mxu0 0.0
    %1003 = vmatpush.msra.mxu0 0.0
    %1004 = vmatpush.msra.mxu0 0.0
    %1005 = vmatpush.msra.mxu0 0.0
    %1006 = vmatpush.msra.mxu0 0.0
    %1007 = vmatpush.msra.mxu0 0.0
    %1008 = vmatpush.msra.mxu0 0.0
    %1009 = vmatpush.msra.mxu0 0.0
    %1010 = vmatpush.msra.mxu0 0.0
    %1011 = vmatpush.msra.mxu0 0.0
    %1012 = vmatpush.msra.mxu0 %v887
    %1013 = vmatpush.msra.mxu0 %v884
    %1014 = vmatpush.msra.mxu0 %v881
    %1015 = vmatpush.msra.mxu0 %v878
    %1016 = vmatmul.f32.gmra.mxu0 %v989
    %v1017 = vpop.f32.mrf.mxu0
    %v1018 = vadd.f32 0.0, %v1017
    %1019 = vmatmul.f32.gmra.mxu0 %v992
    %v1020 = vpop.f32.mrf.mxu0
    %v1021 = vadd.f32 0.0, %v1020
    %1022 = vmatmul.f32.gmra.mxu0 %v995
    %v1023 = vpop.f32.mrf.mxu0
    %v1024 = vadd.f32 0.0, %v1023
    %1025 = vmatmul.f32.gmra.mxu0 %v998
    %v1026 = vpop.f32.mrf.mxu0
    %v1027 = vadd.f32 0.0, %v1026
    %1028 = vdwg.mxu0
    %v1030 = vsel %vm57, %v709, 0
    %v1033 = vsel %vm57, %v724, 0
    %v1036 = vsel %vm57, %v739, 0
    %v1039 = vsel %vm57, %v754, 0
    %1041 = vmatpush.msra.mxu0 0.0
    %1042 = vmatpush.msra.mxu0 0.0
    %1043 = vmatpush.msra.mxu0 0.0
    %1044 = vmatpush.msra.mxu0 0.0
    %1045 = vmatpush.msra.mxu0 0.0
    %1046 = vmatpush.msra.mxu0 0.0
    %1047 = vmatpush.msra.mxu0 0.0
    %1048 = vmatpush.msra.mxu0 0.0
    %1049 = vmatpush.msra.mxu0 0.0
    %1050 = vmatpush.msra.mxu0 0.0
    %1051 = vmatpush.msra.mxu0 0.0
    %1052 = vmatpush.msra.mxu0 0.0
    %1053 = vmatpush.msra.mxu0 %v916
    %1054 = vmatpush.msra.mxu0 %v913
    %1055 = vmatpush.msra.mxu0 %v910
    %1056 = vmatpush.msra.mxu0 %v907
    %1057 = vmatmul.f32.gmra.mxu0 %v1030
    %v1058 = vpop.f32.mrf.mxu0
    %v1059 = vadd.f32 0.0, %v1058
    %1060 = vmatmul.f32.gmra.mxu0 %v1033
    %v1061 = vpop.f32.mrf.mxu0
    %v1062 = vadd.f32 0.0, %v1061
    %1063 = vmatmul.f32.gmra.mxu0 %v1036
    %v1064 = vpop.f32.mrf.mxu0
    %v1065 = vadd.f32 0.0, %v1064
    %1066 = vmatmul.f32.gmra.mxu0 %v1039
    %v1067 = vpop.f32.mrf.mxu0
    %v1068 = vadd.f32 0.0, %v1067
    %1069 = vdwg.mxu0
    %v1071 = vsel %vm57, %v769, 0
    %v1074 = vsel %vm57, %v784, 0
    %v1077 = vsel %vm57, %v799, 0
    %v1080 = vsel %vm57, %v814, 0
    %1082 = vmatpush.msra.mxu0 0.0
    %1083 = vmatpush.msra.mxu0 0.0
    %1084 = vmatpush.msra.mxu0 0.0
    %1085 = vmatpush.msra.mxu0 0.0
    %1086 = vmatpush.msra.mxu0 0.0
    %1087 = vmatpush.msra.mxu0 0.0
    %1088 = vmatpush.msra.mxu0 0.0
    %1089 = vmatpush.msra.mxu0 0.0
    %1090 = vmatpush.msra.mxu0 0.0
    %1091 = vmatpush.msra.mxu0 0.0
    %1092 = vmatpush.msra.mxu0 0.0
    %1093 = vmatpush.msra.mxu0 0.0
    %1094 = vmatpush.msra.mxu0 %v945
    %1095 = vmatpush.msra.mxu0 %v942
    %1096 = vmatpush.msra.mxu0 %v939
    %1097 = vmatpush.msra.mxu0 %v936
    %1098 = vmatmul.f32.gmra.mxu0 %v1071
    %v1099 = vpop.f32.mrf.mxu0
    %v1100 = vadd.f32 0.0, %v1099
    %1101 = vmatmul.f32.gmra.mxu0 %v1074
    %v1102 = vpop.f32.mrf.mxu0
    %v1103 = vadd.f32 0.0, %v1102
    %1104 = vmatmul.f32.gmra.mxu0 %v1077
    %v1105 = vpop.f32.mrf.mxu0
    %v1106 = vadd.f32 0.0, %v1105
    %1107 = vmatmul.f32.gmra.mxu0 %v1080
    %v1108 = vpop.f32.mrf.mxu0
    %v1109 = vadd.f32 0.0, %v1108
    %1110 = vdwg.mxu0
    %v1111 = vadd.f32 %v977, %v1018
    %v1112 = vadd.f32 %v980, %v1021
    %v1113 = vadd.f32 %v983, %v1024
    %v1114 = vadd.f32 %v986, %v1027
    %v1115 = vadd.f32 %v1111, %v1059
    %v1116 = vadd.f32 %v1112, %v1062
    %v1117 = vadd.f32 %v1113, %v1065
    %v1118 = vadd.f32 %v1114, %v1068
    %v1119 = vadd.f32 %v1115, %v1100
    %v1120 = vadd.f32 %v1116, %v1103
    %v1121 = vadd.f32 %v1117, %v1106
    %v1122 = vadd.f32 %v1118, %v1109
    %v1123 = vld [vmem:[%s4] sm:$0x1]
    %v1125 = vperm.slane %v1123, 0
    %v1127 = vadd.f32 %v1119, %v1125
    %v1128 = vadd.f32 %v1120, %v1125
    %v1129 = vadd.f32 %v1121, %v1125
    %v1130 = vadd.f32 %v1122, %v1125
    %1131 = vst.msk [vmem:[#allocation5] sm:$0xff] %vm57, %v1127
    %1132 = vst.msk [vmem:[#allocation5 + $0x8] sm:$0xff] %vm57, %v1128
    %1133 = vst.msk [vmem:[#allocation5 + $0x10] sm:$0xff] %vm57, %v1129
    %1134 = vst.msk [vmem:[#allocation5 + $0x18] sm:$0xff] %vm57, %v1130
    // Predicated region
    $region26: #{sparse_attention_forward.1} parent=1 // pred_check
      _
    $region27: #{sparse_attention_forward.1} parent=1 // pred_check_branch
      %1136 = sbr.rel (0) target = $region29
    $region28: #{sparse_attention_forward.1} parent=1 // pred_region
      %1138 = vsyncadd [#allocation4], 0
      %s1139 = sshll.u32 [#allocation5], 4
      %s1140 = int_to_ptr.vmem [resolvable:$true] %s1139
      %s1141 = sshll.u32 %s5, 4
      %s1142 = int_to_ptr.hbm [resolvable:$true] %s1141
      %1147 = dma.vmem_to_hbm [thread:$0]  %s1140, 512, %s1142, [#allocation4], 128, 128, 8
    $region29: #{sparse_attention_forward.1} parent=1 // pred_fallthru
      _
    // Predicated region
    $region30: #{sparse_attention_forward.1} parent=1 // pred_check
      _
    $region31: #{sparse_attention_forward.1} parent=1 // pred_check_branch
      %1149 = sbr.rel (0) target = $region33
    $region32: #{sparse_attention_forward.1} parent=1 // pred_region
      %1151 = dma.done [#allocation4], 512
    $region33: #{sparse_attention_forward.1} parent=1 // pred_fallthru
      _
    %1152 = vsyncpa [#allocation3], 1
    %1153 = vsyncpa [#allocation4], 1

</llo_original>
